<compile_context>
chip_gen: v7x
topology: tpu7x:2x2x1
jax: 0.10.0
libtpu: 0.0.40
codegen_flags: <defaults>
</compile_context>

<pallas_src>
import numpy as np

import jax
import jax.numpy as jnp
from jax import lax
from jax.experimental import pallas as pl
from jax.experimental.pallas import tpu as pltpu


def _power_of_two(value: int) -> bool:
    return value & (value - 1) == 0


def _round_up(v: int, m: int) -> int:
    return (v + m - 1) // m * m


def _output_channel_pairs(C_in, m, butterfly_size):
    """For each output channel o, the two (input_channel, filter) sources:
    one from x1 (even intermediate channel) and one from the wing-swapped x2
    (odd intermediate channel).  Intermediate channel j = c*m + f (PyTorch
    grouped-conv ordering)."""
    C_int = C_in * m
    C_out = C_int // 2
    pairs = []
    if m == 1:
        # extract first/second halves; swap_wings is the identity.
        for o in range(C_out):
            pairs.append(((o, 0), (o + C_out, 0)))
    else:
        wing = butterfly_size // 2
        for o in range(C_out):
            j1 = 2 * o                                   # x1 source
            q = ((o // butterfly_size) * butterfly_size
                 + ((o % butterfly_size) + wing) % butterfly_size)
            j2 = 2 * q + 1                               # wing-swapped x2 source
            pairs.append(((j1 // m, j1 % m), (j2 // m, j2 % m)))
    return pairs


def _make_kernel(taps, W, padding, HW_p, C_in, need_mask):
    """taps: list of (t, kh, kw); need_mask: per-tap bool (static)."""

    def kernel(w_ref, mask_ref, x_ref, o_ref):
        # w_ref   : (T, Co_p, C_in)  f32 per-tap dense butterfly channel mixers
        # mask_ref: (T, HW_p)        f32 per-tap source-validity masks
        # x_ref   : (1, C_in, HW_p)  lane-dense flattened input
        # o_ref   : (1, Co_p, HW_p)  lane-dense flattened output
        x = x_ref[0].astype(jnp.float32)                 # (C_in, HW_p)
        co_p = o_ref.shape[1]
        acc = jnp.zeros((co_p, HW_p), jnp.float32)       # single packed accumulator

        for t, kh, kw in taps:                           # 9-tap loop stays unrolled
            d = (kh - padding) * W + (kw - padding)      # flat source offset
            # sh[p] = x[p + d] for every valid output position; the wrap the
            # rotation introduces is killed by the combined per-tap mask.
            sh = x if d == 0 else pltpu.roll(x, shift=(-d) % HW_p, axis=1)
            if need_mask[t]:
                sh = sh * mask_ref[pl.ds(t, 1), :]       # (1, HW_p) sublane bcast
            wt = w_ref[t]                                # (Co_p, C_in) from VMEM
            # Sublane-packed MAC: outer-product accumulate per input channel.
            # (Densified butterfly: C_in/2 VALU inflation — fine at small C_in.
            #  TODO(synk): jnp.dot on the MXU / gathered source slabs at scale.)
            for c in range(C_in):
                acc = acc + wt[:, c:c + 1] * sh[c:c + 1, :]

        o_ref[0] = acc.astype(o_ref.dtype)               # one full-tile store

    return kernel


def conv2d_sublayer_pallas(x, weight, *, butterfly_size, stride=1, padding=0,
                           dilation=1):
    """x: (B, C_in, H, W); weight: (C_in, m, KH, KW)
    (weight[c, f] == PyTorch grouped-conv weight[c*m + f, 0])."""
    B, C_in, H, W = x.shape
    C_in_w, m, KH, KW = weight.shape
    assert C_in_w == C_in
    assert stride == 1 and dilation == 1, \
        "TODO(synk): stride > 1 / dilation > 1 not implemented"
    C_int = C_in * m
    assert C_int % 2 == 0
    C_out = C_int // 2
    assert _power_of_two(C_in) and _power_of_two(C_out)
    assert butterfly_size >= 2
    if m > 1:
        assert C_out % butterfly_size == 0, \
            "butterfly_size must tile the x2 channels"

    Ho = H + 2 * padding - KH + 1
    Wo = W + 2 * padding - KW + 1
    assert Ho >= 1 and Wo >= 1
    assert Ho <= H and Wo <= W, \
        "TODO(synk): 2*padding > kernel_size-1 unsupported by flat-shift kernel"

    HW = H * W
    HW_p = _round_up(HW, 128)          # lane-dense loads / unmasked stores
    Co_p = _round_up(C_out, 8)         # sublane-aligned packed accumulator
    T = KH * KW

    pairs = _output_channel_pairs(C_in, m, butterfly_size)
    taps = [(kh * KW + kw, kh, kw) for kh in range(KH) for kw in range(KW)]

    # ---- static (numpy) per-tap validity masks over the padded flat axis ----
    # mask[t, p] = 1 iff output position p (row r, col c) reads a real pixel
    # for tap (kh, kw): covers zero-padding rows, the W-boundary column wrap of
    # the flat shift, and the lane-padding tail, all in one multiply.
    pos = np.arange(HW_p)
    row = pos // W
    col = pos % W
    masks_np = np.zeros((T, HW_p), np.float32)
    for t, kh, kw in taps:
        rs = row + kh - padding
        cs = col + kw - padding
        valid = (pos < HW) & (rs >= 0) & (rs < H) & (cs >= 0) & (cs < W)
        masks_np[t] = valid.astype(np.float32)
    need_mask = [not bool(masks_np[t].all()) for t in range(T)]
    masks = jnp.asarray(masks_np)

    # ---- dense per-tap channel mixers (conv + extract + swap + add fused) ---
    # Built with an exact f32 gather + scatter-add (no matmul/einsum, so no
    # default-precision truncation of the weights).
    o_idx = np.repeat(np.arange(C_out), 2)
    c_idx = np.array([cf[0] for pair in pairs for cf in pair], np.int32)
    f_idx = np.array([cf[1] for pair in pairs for cf in pair], np.int32)
    vals = weight.astype(jnp.float32)[c_idx, f_idx]          # (2*C_out, KH, KW)
    w_oc = jnp.zeros((C_out, C_in, KH, KW), jnp.float32)
    w_oc = w_oc.at[o_idx, c_idx].add(vals)                   # (C_out, C_in, KH, KW)
    w_taps = jnp.transpose(w_oc, (2, 3, 0, 1)).reshape(T, C_out, C_in)
    w_taps = jnp.pad(w_taps, ((0, 0), (0, Co_p - C_out), (0, 0)))

    # ---- lane-dense flattened input -----------------------------------------
    x_flat = x.reshape(B, C_in, HW)
    if HW_p != HW:
        x_flat = jnp.pad(x_flat, ((0, 0), (0, 0), (0, HW_p - HW)))

    kernel = _make_kernel(taps, W, padding, HW_p, C_in, need_mask)

    out_flat = pl.pallas_call(
        kernel,
        out_shape=jax.ShapeDtypeStruct((B, Co_p, HW_p), x.dtype),
        grid_spec=pltpu.PrefetchScalarGridSpec(
            num_scalar_prefetch=0,
            grid=(B,),
            in_specs=[
                pl.BlockSpec((T, Co_p, C_in), lambda b: (0, 0, 0)),  # mixers
                pl.BlockSpec((T, HW_p), lambda b: (0, 0)),           # tap masks
                pl.BlockSpec((1, C_in, HW_p), lambda b: (b, 0, 0)),  # input
            ],
            out_specs=pl.BlockSpec((1, Co_p, HW_p), lambda b: (b, 0, 0)),
        ),
        compiler_params=pltpu.CompilerParams(
            dimension_semantics=("parallel",)),
    )(w_taps, masks, x_flat)

    out = out_flat[:, :C_out, :HW].reshape(B, C_out, H, W)
    if Ho != H or Wo != W:
        out = out[:, :, :Ho, :Wo]
    return out


def conv2d_sublayer_ref(x, weight, *, butterfly_size, padding=0):
    """Pure-JAX reference mirroring the PyTorch forward."""
    B, C_in, H, W = x.shape
    _, m, KH, KW = weight.shape
    C_int = C_in * m
    C_out = C_int // 2
    wing = butterfly_size // 2
    butterflies = C_out // butterfly_size

    w_oihw = weight.reshape(C_int, 1, KH, KW)
    y = lax.conv_general_dilated(
        x, w_oihw, window_strides=(1, 1),
        padding=((padding, padding), (padding, padding)),
        dimension_numbers=('NCHW', 'OIHW', 'NCHW'),
        feature_group_count=C_in)
    Ho, Wo = y.shape[2], y.shape[3]

    if m == 1:
        x1, x2 = y[:, :C_int // 2], y[:, C_int // 2:]
        return x1 + x2
    sp = y.reshape(B, C_int // 2, 2, Ho, Wo)
    x1, x2 = sp[:, :, 0], sp[:, :, 1]
    x2r = x2.reshape(B, butterflies, 2, wing, Ho, Wo)
    x2s = jnp.concatenate([x2r[:, :, 1:], x2r[:, :, :1]], axis=2)
    x2s = x2s.reshape(B, C_out, Ho, Wo)
    return x1 + x2s


if __name__ == "__main__":
    # Module config: in_channels=4, out_channels=4, kernel_size=3,
    # butterfly_size=4, padding=1  ->  expansion=1, filters_per_channel=2,
    # intermediate_channels=8, butterflies=1.
    B, C_in, H, W = 2, 4, 16, 16
    out_channels = 4
    KH = KW = 3
    butterfly_size = 4
    padding = 1

    expansion = out_channels / C_in
    m = int(2 * expansion)                     # filters_per_channel

    key = jax.random.PRNGKey(0)
    kx, kw_key = jax.random.split(key)
    x = jax.random.normal(kx, (B, C_in, H, W), jnp.float32)
    # weight[c, f] == PyTorch grouped-conv weight[c*m + f, 0]
    weight = jax.random.normal(kw_key, (C_in, m, KH, KW), jnp.float32) * 0.1

    out = conv2d_sublayer_pallas(x, weight,
                                 butterfly_size=butterfly_size,
                                 padding=padding)
    out = jax.block_until_ready(out)

    ref = conv2d_sublayer_ref(x, weight,
                              butterfly_size=butterfly_size,
                              padding=padding)
    assert out.shape == (B, out_channels, H, W), out.shape
    assert jnp.allclose(out, ref, atol=1e-5, rtol=1e-5), \
        float(jnp.max(jnp.abs(out - ref)))

    print("KERNEL_OK")
</pallas_src>

<mosaic_0001>
module attributes {stable_mosaic.version = 11 : i64} {
  func.func @kernel(%arg0: i32, %arg1: memref<9x8x4xf32, #tpu.memory_space<vmem>>, %arg2: memref<9x256xf32, #tpu.memory_space<vmem>>, %arg3: memref<1x4x256xf32, #tpu.memory_space<vmem>>, %arg4: memref<1x8x256xf32, #tpu.memory_space<vmem>>) attributes {dimension_semantics = [#tpu.dimension_semantics<parallel>], iteration_bounds = array<i64: 2>, scalar_prefetch = 0 : i64, scratch_operands = 0 : i64, tpu.core_type = #tpu.core_type<tc>, window_params = [{pipeline_mode = #tpu.pipeline_mode<synchronous>, transform_indices = @transform_0, window_bounds = array<i64: 9, 8, 4>}, {pipeline_mode = #tpu.pipeline_mode<synchronous>, transform_indices = @transform_1, window_bounds = array<i64: 9, 256>}, {transform_indices = @transform_2, window_bounds = array<i64: 1, 4, 256>}, {transform_indices = @transform_3, window_bounds = array<i64: 1, 8, 256>}]} {
    %c0 = arith.constant 0 : index
    %c0_0 = arith.constant 0 : index
    %c0_1 = arith.constant 0 : index
    %0 = vector.load %arg3[%c0, %c0_0, %c0_1] : memref<1x4x256xf32, #tpu.memory_space<vmem>>, vector<1x4x256xf32>
    %1 = vector.shape_cast %0 : vector<1x4x256xf32> to vector<4x256xf32>
    %cst = arith.constant 0.000000e+00 : f32
    %2 = vector.broadcast %cst : f32 to vector<8x256xf32>
    %c17_i32 = arith.constant 17 : i32
    %3 = tpu.dynamic_rotate %1 by %c17_i32 dim 1 : vector<4x256xf32>, i32 -> vector<4x256xf32>
    %c0_2 = arith.constant 0 : index
    %c0_3 = arith.constant 0 : index
    %4 = vector.load %arg2[%c0_2, %c0_3] : memref<9x256xf32, #tpu.memory_space<vmem>>, vector<1x256xf32>
    %5 = vector.broadcast %4 : vector<1x256xf32> to vector<4x256xf32>
    %6 = arith.mulf %3, %5 : vector<4x256xf32>
    %c0_4 = arith.constant 0 : index
    %c0_5 = arith.constant 0 : index
    %c0_6 = arith.constant 0 : index
    %7 = vector.load %arg1[%c0_4, %c0_5, %c0_6] : memref<9x8x4xf32, #tpu.memory_space<vmem>>, vector<1x8x4xf32>
    %8 = vector.shape_cast %7 : vector<1x8x4xf32> to vector<8x4xf32>
    %9 = vector.extract_strided_slice %8 {offsets = [0, 0], sizes = [8, 1], strides = [1, 1]} : vector<8x4xf32> to vector<8x1xf32>
    %10 = vector.extract_strided_slice %6 {offsets = [0, 0], sizes = [1, 256], strides = [1, 1]} : vector<4x256xf32> to vector<1x256xf32>
    %11 = vector.broadcast %9 : vector<8x1xf32> to vector<8x256xf32>
    %12 = vector.broadcast %10 : vector<1x256xf32> to vector<8x256xf32>
    %13 = arith.mulf %11, %12 : vector<8x256xf32>
    %14 = arith.addf %2, %13 : vector<8x256xf32>
    %15 = vector.extract_strided_slice %8 {offsets = [0, 1], sizes = [8, 1], strides = [1, 1]} : vector<8x4xf32> to vector<8x1xf32>
    %16 = vector.extract_strided_slice %6 {offsets = [1, 0], sizes = [1, 256], strides = [1, 1]} : vector<4x256xf32> to vector<1x256xf32>
    %17 = vector.broadcast %15 : vector<8x1xf32> to vector<8x256xf32>
    %18 = vector.broadcast %16 : vector<1x256xf32> to vector<8x256xf32>
    %19 = arith.mulf %17, %18 : vector<8x256xf32>
    %20 = arith.addf %14, %19 : vector<8x256xf32>
    %21 = vector.extract_strided_slice %8 {offsets = [0, 2], sizes = [8, 1], strides = [1, 1]} : vector<8x4xf32> to vector<8x1xf32>
    %22 = vector.extract_strided_slice %6 {offsets = [2, 0], sizes = [1, 256], strides = [1, 1]} : vector<4x256xf32> to vector<1x256xf32>
    %23 = vector.broadcast %21 : vector<8x1xf32> to vector<8x256xf32>
    %24 = vector.broadcast %22 : vector<1x256xf32> to vector<8x256xf32>
    %25 = arith.mulf %23, %24 : vector<8x256xf32>
    %26 = arith.addf %20, %25 : vector<8x256xf32>
    %27 = vector.extract_strided_slice %8 {offsets = [0, 3], sizes = [8, 1], strides = [1, 1]} : vector<8x4xf32> to vector<8x1xf32>
    %28 = vector.extract_strided_slice %6 {offsets = [3, 0], sizes = [1, 256], strides = [1, 1]} : vector<4x256xf32> to vector<1x256xf32>
    %29 = vector.broadcast %27 : vector<8x1xf32> to vector<8x256xf32>
    %30 = vector.broadcast %28 : vector<1x256xf32> to vector<8x256xf32>
    %31 = arith.mulf %29, %30 : vector<8x256xf32>
    %32 = arith.addf %26, %31 : vector<8x256xf32>
    %c16_i32 = arith.constant 16 : i32
    %33 = tpu.dynamic_rotate %1 by %c16_i32 dim 1 : vector<4x256xf32>, i32 -> vector<4x256xf32>
    %c1 = arith.constant 1 : index
    %c0_7 = arith.constant 0 : index
    %34 = vector.load %arg2[%c1, %c0_7] : memref<9x256xf32, #tpu.memory_space<vmem>>, vector<1x256xf32>
    %35 = vector.broadcast %34 : vector<1x256xf32> to vector<4x256xf32>
    %36 = arith.mulf %33, %35 : vector<4x256xf32>
    %c1_8 = arith.constant 1 : index
    %c0_9 = arith.constant 0 : index
    %c0_10 = arith.constant 0 : index
    %37 = vector.load %arg1[%c1_8, %c0_9, %c0_10] : memref<9x8x4xf32, #tpu.memory_space<vmem>>, vector<1x8x4xf32>
    %38 = vector.shape_cast %37 : vector<1x8x4xf32> to vector<8x4xf32>
    %39 = vector.extract_strided_slice %38 {offsets = [0, 0], sizes = [8, 1], strides = [1, 1]} : vector<8x4xf32> to vector<8x1xf32>
    %40 = vector.extract_strided_slice %36 {offsets = [0, 0], sizes = [1, 256], strides = [1, 1]} : vector<4x256xf32> to vector<1x256xf32>
    %41 = vector.broadcast %39 : vector<8x1xf32> to vector<8x256xf32>
    %42 = vector.broadcast %40 : vector<1x256xf32> to vector<8x256xf32>
    %43 = arith.mulf %41, %42 : vector<8x256xf32>
    %44 = arith.addf %32, %43 : vector<8x256xf32>
    %45 = vector.extract_strided_slice %38 {offsets = [0, 1], sizes = [8, 1], strides = [1, 1]} : vector<8x4xf32> to vector<8x1xf32>
    %46 = vector.extract_strided_slice %36 {offsets = [1, 0], sizes = [1, 256], strides = [1, 1]} : vector<4x256xf32> to vector<1x256xf32>
    %47 = vector.broadcast %45 : vector<8x1xf32> to vector<8x256xf32>
    %48 = vector.broadcast %46 : vector<1x256xf32> to vector<8x256xf32>
    %49 = arith.mulf %47, %48 : vector<8x256xf32>
    %50 = arith.addf %44, %49 : vector<8x256xf32>
    %51 = vector.extract_strided_slice %38 {offsets = [0, 2], sizes = [8, 1], strides = [1, 1]} : vector<8x4xf32> to vector<8x1xf32>
    %52 = vector.extract_strided_slice %36 {offsets = [2, 0], sizes = [1, 256], strides = [1, 1]} : vector<4x256xf32> to vector<1x256xf32>
    %53 = vector.broadcast %51 : vector<8x1xf32> to vector<8x256xf32>
    %54 = vector.broadcast %52 : vector<1x256xf32> to vector<8x256xf32>
    %55 = arith.mulf %53, %54 : vector<8x256xf32>
    %56 = arith.addf %50, %55 : vector<8x256xf32>
    %57 = vector.extract_strided_slice %38 {offsets = [0, 3], sizes = [8, 1], strides = [1, 1]} : vector<8x4xf32> to vector<8x1xf32>
    %58 = vector.extract_strided_slice %36 {offsets = [3, 0], sizes = [1, 256], strides = [1, 1]} : vector<4x256xf32> to vector<1x256xf32>
    %59 = vector.broadcast %57 : vector<8x1xf32> to vector<8x256xf32>
    %60 = vector.broadcast %58 : vector<1x256xf32> to vector<8x256xf32>
    %61 = arith.mulf %59, %60 : vector<8x256xf32>
    %62 = arith.addf %56, %61 : vector<8x256xf32>
    %c15_i32 = arith.constant 15 : i32
    %63 = tpu.dynamic_rotate %1 by %c15_i32 dim 1 : vector<4x256xf32>, i32 -> vector<4x256xf32>
    %c2 = arith.constant 2 : index
    %c0_11 = arith.constant 0 : index
    %64 = vector.load %arg2[%c2, %c0_11] : memref<9x256xf32, #tpu.memory_space<vmem>>, vector<1x256xf32>
    %65 = vector.broadcast %64 : vector<1x256xf32> to vector<4x256xf32>
    %66 = arith.mulf %63, %65 : vector<4x256xf32>
    %c2_12 = arith.constant 2 : index
    %c0_13 = arith.constant 0 : index
    %c0_14 = arith.constant 0 : index
    %67 = vector.load %arg1[%c2_12, %c0_13, %c0_14] : memref<9x8x4xf32, #tpu.memory_space<vmem>>, vector<1x8x4xf32>
    %68 = vector.shape_cast %67 : vector<1x8x4xf32> to vector<8x4xf32>
    %69 = vector.extract_strided_slice %68 {offsets = [0, 0], sizes = [8, 1], strides = [1, 1]} : vector<8x4xf32> to vector<8x1xf32>
    %70 = vector.extract_strided_slice %66 {offsets = [0, 0], sizes = [1, 256], strides = [1, 1]} : vector<4x256xf32> to vector<1x256xf32>
    %71 = vector.broadcast %69 : vector<8x1xf32> to vector<8x256xf32>
    %72 = vector.broadcast %70 : vector<1x256xf32> to vector<8x256xf32>
    %73 = arith.mulf %71, %72 : vector<8x256xf32>
    %74 = arith.addf %62, %73 : vector<8x256xf32>
    %75 = vector.extract_strided_slice %68 {offsets = [0, 1], sizes = [8, 1], strides = [1, 1]} : vector<8x4xf32> to vector<8x1xf32>
    %76 = vector.extract_strided_slice %66 {offsets = [1, 0], sizes = [1, 256], strides = [1, 1]} : vector<4x256xf32> to vector<1x256xf32>
    %77 = vector.broadcast %75 : vector<8x1xf32> to vector<8x256xf32>
    %78 = vector.broadcast %76 : vector<1x256xf32> to vector<8x256xf32>
    %79 = arith.mulf %77, %78 : vector<8x256xf32>
    %80 = arith.addf %74, %79 : vector<8x256xf32>
    %81 = vector.extract_strided_slice %68 {offsets = [0, 2], sizes = [8, 1], strides = [1, 1]} : vector<8x4xf32> to vector<8x1xf32>
    %82 = vector.extract_strided_slice %66 {offsets = [2, 0], sizes = [1, 256], strides = [1, 1]} : vector<4x256xf32> to vector<1x256xf32>
    %83 = vector.broadcast %81 : vector<8x1xf32> to vector<8x256xf32>
    %84 = vector.broadcast %82 : vector<1x256xf32> to vector<8x256xf32>
    %85 = arith.mulf %83, %84 : vector<8x256xf32>
    %86 = arith.addf %80, %85 : vector<8x256xf32>
    %87 = vector.extract_strided_slice %68 {offsets = [0, 3], sizes = [8, 1], strides = [1, 1]} : vector<8x4xf32> to vector<8x1xf32>
    %88 = vector.extract_strided_slice %66 {offsets = [3, 0], sizes = [1, 256], strides = [1, 1]} : vector<4x256xf32> to vector<1x256xf32>
    %89 = vector.broadcast %87 : vector<8x1xf32> to vector<8x256xf32>
    %90 = vector.broadcast %88 : vector<1x256xf32> to vector<8x256xf32>
    %91 = arith.mulf %89, %90 : vector<8x256xf32>
    %92 = arith.addf %86, %91 : vector<8x256xf32>
    %c1_i32 = arith.constant 1 : i32
    %93 = tpu.dynamic_rotate %1 by %c1_i32 dim 1 : vector<4x256xf32>, i32 -> vector<4x256xf32>
    %c3 = arith.constant 3 : index
    %c0_15 = arith.constant 0 : index
    %94 = vector.load %arg2[%c3, %c0_15] : memref<9x256xf32, #tpu.memory_space<vmem>>, vector<1x256xf32>
    %95 = vector.broadcast %94 : vector<1x256xf32> to vector<4x256xf32>
    %96 = arith.mulf %93, %95 : vector<4x256xf32>
    %c3_16 = arith.constant 3 : index
    %c0_17 = arith.constant 0 : index
    %c0_18 = arith.constant 0 : index
    %97 = vector.load %arg1[%c3_16, %c0_17, %c0_18] : memref<9x8x4xf32, #tpu.memory_space<vmem>>, vector<1x8x4xf32>
    %98 = vector.shape_cast %97 : vector<1x8x4xf32> to vector<8x4xf32>
    %99 = vector.extract_strided_slice %98 {offsets = [0, 0], sizes = [8, 1], strides = [1, 1]} : vector<8x4xf32> to vector<8x1xf32>
    %100 = vector.extract_strided_slice %96 {offsets = [0, 0], sizes = [1, 256], strides = [1, 1]} : vector<4x256xf32> to vector<1x256xf32>
    %101 = vector.broadcast %99 : vector<8x1xf32> to vector<8x256xf32>
    %102 = vector.broadcast %100 : vector<1x256xf32> to vector<8x256xf32>
    %103 = arith.mulf %101, %102 : vector<8x256xf32>
    %104 = arith.addf %92, %103 : vector<8x256xf32>
    %105 = vector.extract_strided_slice %98 {offsets = [0, 1], sizes = [8, 1], strides = [1, 1]} : vector<8x4xf32> to vector<8x1xf32>
    %106 = vector.extract_strided_slice %96 {offsets = [1, 0], sizes = [1, 256], strides = [1, 1]} : vector<4x256xf32> to vector<1x256xf32>
    %107 = vector.broadcast %105 : vector<8x1xf32> to vector<8x256xf32>
    %108 = vector.broadcast %106 : vector<1x256xf32> to vector<8x256xf32>
    %109 = arith.mulf %107, %108 : vector<8x256xf32>
    %110 = arith.addf %104, %109 : vector<8x256xf32>
    %111 = vector.extract_strided_slice %98 {offsets = [0, 2], sizes = [8, 1], strides = [1, 1]} : vector<8x4xf32> to vector<8x1xf32>
    %112 = vector.extract_strided_slice %96 {offsets = [2, 0], sizes = [1, 256], strides = [1, 1]} : vector<4x256xf32> to vector<1x256xf32>
    %113 = vector.broadcast %111 : vector<8x1xf32> to vector<8x256xf32>
    %114 = vector.broadcast %112 : vector<1x256xf32> to vector<8x256xf32>
    %115 = arith.mulf %113, %114 : vector<8x256xf32>
    %116 = arith.addf %110, %115 : vector<8x256xf32>
    %117 = vector.extract_strided_slice %98 {offsets = [0, 3], sizes = [8, 1], strides = [1, 1]} : vector<8x4xf32> to vector<8x1xf32>
    %118 = vector.extract_strided_slice %96 {offsets = [3, 0], sizes = [1, 256], strides = [1, 1]} : vector<4x256xf32> to vector<1x256xf32>
    %119 = vector.broadcast %117 : vector<8x1xf32> to vector<8x256xf32>
    %120 = vector.broadcast %118 : vector<1x256xf32> to vector<8x256xf32>
    %121 = arith.mulf %119, %120 : vector<8x256xf32>
    %122 = arith.addf %116, %121 : vector<8x256xf32>
    %c4 = arith.constant 4 : index
    %c0_19 = arith.constant 0 : index
    %c0_20 = arith.constant 0 : index
    %123 = vector.load %arg1[%c4, %c0_19, %c0_20] : memref<9x8x4xf32, #tpu.memory_space<vmem>>, vector<1x8x4xf32>
    %124 = vector.shape_cast %123 : vector<1x8x4xf32> to vector<8x4xf32>
    %125 = vector.extract_strided_slice %124 {offsets = [0, 0], sizes = [8, 1], strides = [1, 1]} : vector<8x4xf32> to vector<8x1xf32>
    %126 = vector.extract_strided_slice %1 {offsets = [0, 0], sizes = [1, 256], strides = [1, 1]} : vector<4x256xf32> to vector<1x256xf32>
    %127 = vector.broadcast %125 : vector<8x1xf32> to vector<8x256xf32>
    %128 = vector.broadcast %126 : vector<1x256xf32> to vector<8x256xf32>
    %129 = arith.mulf %127, %128 : vector<8x256xf32>
    %130 = arith.addf %122, %129 : vector<8x256xf32>
    %131 = vector.extract_strided_slice %124 {offsets = [0, 1], sizes = [8, 1], strides = [1, 1]} : vector<8x4xf32> to vector<8x1xf32>
    %132 = vector.extract_strided_slice %1 {offsets = [1, 0], sizes = [1, 256], strides = [1, 1]} : vector<4x256xf32> to vector<1x256xf32>
    %133 = vector.broadcast %131 : vector<8x1xf32> to vector<8x256xf32>
    %134 = vector.broadcast %132 : vector<1x256xf32> to vector<8x256xf32>
    %135 = arith.mulf %133, %134 : vector<8x256xf32>
    %136 = arith.addf %130, %135 : vector<8x256xf32>
    %137 = vector.extract_strided_slice %124 {offsets = [0, 2], sizes = [8, 1], strides = [1, 1]} : vector<8x4xf32> to vector<8x1xf32>
    %138 = vector.extract_strided_slice %1 {offsets = [2, 0], sizes = [1, 256], strides = [1, 1]} : vector<4x256xf32> to vector<1x256xf32>
    %139 = vector.broadcast %137 : vector<8x1xf32> to vector<8x256xf32>
    %140 = vector.broadcast %138 : vector<1x256xf32> to vector<8x256xf32>
    %141 = arith.mulf %139, %140 : vector<8x256xf32>
    %142 = arith.addf %136, %141 : vector<8x256xf32>
    %143 = vector.extract_strided_slice %124 {offsets = [0, 3], sizes = [8, 1], strides = [1, 1]} : vector<8x4xf32> to vector<8x1xf32>
    %144 = vector.extract_strided_slice %1 {offsets = [3, 0], sizes = [1, 256], strides = [1, 1]} : vector<4x256xf32> to vector<1x256xf32>
    %145 = vector.broadcast %143 : vector<8x1xf32> to vector<8x256xf32>
    %146 = vector.broadcast %144 : vector<1x256xf32> to vector<8x256xf32>
    %147 = arith.mulf %145, %146 : vector<8x256xf32>
    %148 = arith.addf %142, %147 : vector<8x256xf32>
    %c255_i32 = arith.constant 255 : i32
    %149 = tpu.dynamic_rotate %1 by %c255_i32 dim 1 : vector<4x256xf32>, i32 -> vector<4x256xf32>
    %c5 = arith.constant 5 : index
    %c0_21 = arith.constant 0 : index
    %150 = vector.load %arg2[%c5, %c0_21] : memref<9x256xf32, #tpu.memory_space<vmem>>, vector<1x256xf32>
    %151 = vector.broadcast %150 : vector<1x256xf32> to vector<4x256xf32>
    %152 = arith.mulf %149, %151 : vector<4x256xf32>
    %c5_22 = arith.constant 5 : index
    %c0_23 = arith.constant 0 : index
    %c0_24 = arith.constant 0 : index
    %153 = vector.load %arg1[%c5_22, %c0_23, %c0_24] : memref<9x8x4xf32, #tpu.memory_space<vmem>>, vector<1x8x4xf32>
    %154 = vector.shape_cast %153 : vector<1x8x4xf32> to vector<8x4xf32>
    %155 = vector.extract_strided_slice %154 {offsets = [0, 0], sizes = [8, 1], strides = [1, 1]} : vector<8x4xf32> to vector<8x1xf32>
    %156 = vector.extract_strided_slice %152 {offsets = [0, 0], sizes = [1, 256], strides = [1, 1]} : vector<4x256xf32> to vector<1x256xf32>
    %157 = vector.broadcast %155 : vector<8x1xf32> to vector<8x256xf32>
    %158 = vector.broadcast %156 : vector<1x256xf32> to vector<8x256xf32>
    %159 = arith.mulf %157, %158 : vector<8x256xf32>
    %160 = arith.addf %148, %159 : vector<8x256xf32>
    %161 = vector.extract_strided_slice %154 {offsets = [0, 1], sizes = [8, 1], strides = [1, 1]} : vector<8x4xf32> to vector<8x1xf32>
    %162 = vector.extract_strided_slice %152 {offsets = [1, 0], sizes = [1, 256], strides = [1, 1]} : vector<4x256xf32> to vector<1x256xf32>
    %163 = vector.broadcast %161 : vector<8x1xf32> to vector<8x256xf32>
    %164 = vector.broadcast %162 : vector<1x256xf32> to vector<8x256xf32>
    %165 = arith.mulf %163, %164 : vector<8x256xf32>
    %166 = arith.addf %160, %165 : vector<8x256xf32>
    %167 = vector.extract_strided_slice %154 {offsets = [0, 2], sizes = [8, 1], strides = [1, 1]} : vector<8x4xf32> to vector<8x1xf32>
    %168 = vector.extract_strided_slice %152 {offsets = [2, 0], sizes = [1, 256], strides = [1, 1]} : vector<4x256xf32> to vector<1x256xf32>
    %169 = vector.broadcast %167 : vector<8x1xf32> to vector<8x256xf32>
    %170 = vector.broadcast %168 : vector<1x256xf32> to vector<8x256xf32>
    %171 = arith.mulf %169, %170 : vector<8x256xf32>
    %172 = arith.addf %166, %171 : vector<8x256xf32>
    %173 = vector.extract_strided_slice %154 {offsets = [0, 3], sizes = [8, 1], strides = [1, 1]} : vector<8x4xf32> to vector<8x1xf32>
    %174 = vector.extract_strided_slice %152 {offsets = [3, 0], sizes = [1, 256], strides = [1, 1]} : vector<4x256xf32> to vector<1x256xf32>
    %175 = vector.broadcast %173 : vector<8x1xf32> to vector<8x256xf32>
    %176 = vector.broadcast %174 : vector<1x256xf32> to vector<8x256xf32>
    %177 = arith.mulf %175, %176 : vector<8x256xf32>
    %178 = arith.addf %172, %177 : vector<8x256xf32>
    %c241_i32 = arith.constant 241 : i32
    %179 = tpu.dynamic_rotate %1 by %c241_i32 dim 1 : vector<4x256xf32>, i32 -> vector<4x256xf32>
    %c6 = arith.constant 6 : index
    %c0_25 = arith.constant 0 : index
    %180 = vector.load %arg2[%c6, %c0_25] : memref<9x256xf32, #tpu.memory_space<vmem>>, vector<1x256xf32>
    %181 = vector.broadcast %180 : vector<1x256xf32> to vector<4x256xf32>
    %182 = arith.mulf %179, %181 : vector<4x256xf32>
    %c6_26 = arith.constant 6 : index
    %c0_27 = arith.constant 0 : index
    %c0_28 = arith.constant 0 : index
    %183 = vector.load %arg1[%c6_26, %c0_27, %c0_28] : memref<9x8x4xf32, #tpu.memory_space<vmem>>, vector<1x8x4xf32>
    %184 = vector.shape_cast %183 : vector<1x8x4xf32> to vector<8x4xf32>
    %185 = vector.extract_strided_slice %184 {offsets = [0, 0], sizes = [8, 1], strides = [1, 1]} : vector<8x4xf32> to vector<8x1xf32>
    %186 = vector.extract_strided_slice %182 {offsets = [0, 0], sizes = [1, 256], strides = [1, 1]} : vector<4x256xf32> to vector<1x256xf32>
    %187 = vector.broadcast %185 : vector<8x1xf32> to vector<8x256xf32>
    %188 = vector.broadcast %186 : vector<1x256xf32> to vector<8x256xf32>
    %189 = arith.mulf %187, %188 : vector<8x256xf32>
    %190 = arith.addf %178, %189 : vector<8x256xf32>
    %191 = vector.extract_strided_slice %184 {offsets = [0, 1], sizes = [8, 1], strides = [1, 1]} : vector<8x4xf32> to vector<8x1xf32>
    %192 = vector.extract_strided_slice %182 {offsets = [1, 0], sizes = [1, 256], strides = [1, 1]} : vector<4x256xf32> to vector<1x256xf32>
    %193 = vector.broadcast %191 : vector<8x1xf32> to vector<8x256xf32>
    %194 = vector.broadcast %192 : vector<1x256xf32> to vector<8x256xf32>
    %195 = arith.mulf %193, %194 : vector<8x256xf32>
    %196 = arith.addf %190, %195 : vector<8x256xf32>
    %197 = vector.extract_strided_slice %184 {offsets = [0, 2], sizes = [8, 1], strides = [1, 1]} : vector<8x4xf32> to vector<8x1xf32>
    %198 = vector.extract_strided_slice %182 {offsets = [2, 0], sizes = [1, 256], strides = [1, 1]} : vector<4x256xf32> to vector<1x256xf32>
    %199 = vector.broadcast %197 : vector<8x1xf32> to vector<8x256xf32>
    %200 = vector.broadcast %198 : vector<1x256xf32> to vector<8x256xf32>
    %201 = arith.mulf %199, %200 : vector<8x256xf32>
    %202 = arith.addf %196, %201 : vector<8x256xf32>
    %203 = vector.extract_strided_slice %184 {offsets = [0, 3], sizes = [8, 1], strides = [1, 1]} : vector<8x4xf32> to vector<8x1xf32>
    %204 = vector.extract_strided_slice %182 {offsets = [3, 0], sizes = [1, 256], strides = [1, 1]} : vector<4x256xf32> to vector<1x256xf32>
    %205 = vector.broadcast %203 : vector<8x1xf32> to vector<8x256xf32>
    %206 = vector.broadcast %204 : vector<1x256xf32> to vector<8x256xf32>
    %207 = arith.mulf %205, %206 : vector<8x256xf32>
    %208 = arith.addf %202, %207 : vector<8x256xf32>
    %c240_i32 = arith.constant 240 : i32
    %209 = tpu.dynamic_rotate %1 by %c240_i32 dim 1 : vector<4x256xf32>, i32 -> vector<4x256xf32>
    %c7 = arith.constant 7 : index
    %c0_29 = arith.constant 0 : index
    %210 = vector.load %arg2[%c7, %c0_29] : memref<9x256xf32, #tpu.memory_space<vmem>>, vector<1x256xf32>
    %211 = vector.broadcast %210 : vector<1x256xf32> to vector<4x256xf32>
    %212 = arith.mulf %209, %211 : vector<4x256xf32>
    %c7_30 = arith.constant 7 : index
    %c0_31 = arith.constant 0 : index
    %c0_32 = arith.constant 0 : index
    %213 = vector.load %arg1[%c7_30, %c0_31, %c0_32] : memref<9x8x4xf32, #tpu.memory_space<vmem>>, vector<1x8x4xf32>
    %214 = vector.shape_cast %213 : vector<1x8x4xf32> to vector<8x4xf32>
    %215 = vector.extract_strided_slice %214 {offsets = [0, 0], sizes = [8, 1], strides = [1, 1]} : vector<8x4xf32> to vector<8x1xf32>
    %216 = vector.extract_strided_slice %212 {offsets = [0, 0], sizes = [1, 256], strides = [1, 1]} : vector<4x256xf32> to vector<1x256xf32>
    %217 = vector.broadcast %215 : vector<8x1xf32> to vector<8x256xf32>
    %218 = vector.broadcast %216 : vector<1x256xf32> to vector<8x256xf32>
    %219 = arith.mulf %217, %218 : vector<8x256xf32>
    %220 = arith.addf %208, %219 : vector<8x256xf32>
    %221 = vector.extract_strided_slice %214 {offsets = [0, 1], sizes = [8, 1], strides = [1, 1]} : vector<8x4xf32> to vector<8x1xf32>
    %222 = vector.extract_strided_slice %212 {offsets = [1, 0], sizes = [1, 256], strides = [1, 1]} : vector<4x256xf32> to vector<1x256xf32>
    %223 = vector.broadcast %221 : vector<8x1xf32> to vector<8x256xf32>
    %224 = vector.broadcast %222 : vector<1x256xf32> to vector<8x256xf32>
    %225 = arith.mulf %223, %224 : vector<8x256xf32>
    %226 = arith.addf %220, %225 : vector<8x256xf32>
    %227 = vector.extract_strided_slice %214 {offsets = [0, 2], sizes = [8, 1], strides = [1, 1]} : vector<8x4xf32> to vector<8x1xf32>
    %228 = vector.extract_strided_slice %212 {offsets = [2, 0], sizes = [1, 256], strides = [1, 1]} : vector<4x256xf32> to vector<1x256xf32>
    %229 = vector.broadcast %227 : vector<8x1xf32> to vector<8x256xf32>
    %230 = vector.broadcast %228 : vector<1x256xf32> to vector<8x256xf32>
    %231 = arith.mulf %229, %230 : vector<8x256xf32>
    %232 = arith.addf %226, %231 : vector<8x256xf32>
    %233 = vector.extract_strided_slice %214 {offsets = [0, 3], sizes = [8, 1], strides = [1, 1]} : vector<8x4xf32> to vector<8x1xf32>
    %234 = vector.extract_strided_slice %212 {offsets = [3, 0], sizes = [1, 256], strides = [1, 1]} : vector<4x256xf32> to vector<1x256xf32>
    %235 = vector.broadcast %233 : vector<8x1xf32> to vector<8x256xf32>
    %236 = vector.broadcast %234 : vector<1x256xf32> to vector<8x256xf32>
    %237 = arith.mulf %235, %236 : vector<8x256xf32>
    %238 = arith.addf %232, %237 : vector<8x256xf32>
    %c239_i32 = arith.constant 239 : i32
    %239 = tpu.dynamic_rotate %1 by %c239_i32 dim 1 : vector<4x256xf32>, i32 -> vector<4x256xf32>
    %c8 = arith.constant 8 : index
    %c0_33 = arith.constant 0 : index
    %240 = vector.load %arg2[%c8, %c0_33] : memref<9x256xf32, #tpu.memory_space<vmem>>, vector<1x256xf32>
    %241 = vector.broadcast %240 : vector<1x256xf32> to vector<4x256xf32>
    %242 = arith.mulf %239, %241 : vector<4x256xf32>
    %c8_34 = arith.constant 8 : index
    %c0_35 = arith.constant 0 : index
    %c0_36 = arith.constant 0 : index
    %243 = vector.load %arg1[%c8_34, %c0_35, %c0_36] : memref<9x8x4xf32, #tpu.memory_space<vmem>>, vector<1x8x4xf32>
    %244 = vector.shape_cast %243 : vector<1x8x4xf32> to vector<8x4xf32>
    %245 = vector.extract_strided_slice %244 {offsets = [0, 0], sizes = [8, 1], strides = [1, 1]} : vector<8x4xf32> to vector<8x1xf32>
    %246 = vector.extract_strided_slice %242 {offsets = [0, 0], sizes = [1, 256], strides = [1, 1]} : vector<4x256xf32> to vector<1x256xf32>
    %247 = vector.broadcast %245 : vector<8x1xf32> to vector<8x256xf32>
    %248 = vector.broadcast %246 : vector<1x256xf32> to vector<8x256xf32>
    %249 = arith.mulf %247, %248 : vector<8x256xf32>
    %250 = arith.addf %238, %249 : vector<8x256xf32>
    %251 = vector.extract_strided_slice %244 {offsets = [0, 1], sizes = [8, 1], strides = [1, 1]} : vector<8x4xf32> to vector<8x1xf32>
    %252 = vector.extract_strided_slice %242 {offsets = [1, 0], sizes = [1, 256], strides = [1, 1]} : vector<4x256xf32> to vector<1x256xf32>
    %253 = vector.broadcast %251 : vector<8x1xf32> to vector<8x256xf32>
    %254 = vector.broadcast %252 : vector<1x256xf32> to vector<8x256xf32>
    %255 = arith.mulf %253, %254 : vector<8x256xf32>
    %256 = arith.addf %250, %255 : vector<8x256xf32>
    %257 = vector.extract_strided_slice %244 {offsets = [0, 2], sizes = [8, 1], strides = [1, 1]} : vector<8x4xf32> to vector<8x1xf32>
    %258 = vector.extract_strided_slice %242 {offsets = [2, 0], sizes = [1, 256], strides = [1, 1]} : vector<4x256xf32> to vector<1x256xf32>
    %259 = vector.broadcast %257 : vector<8x1xf32> to vector<8x256xf32>
    %260 = vector.broadcast %258 : vector<1x256xf32> to vector<8x256xf32>
    %261 = arith.mulf %259, %260 : vector<8x256xf32>
    %262 = arith.addf %256, %261 : vector<8x256xf32>
    %263 = vector.extract_strided_slice %244 {offsets = [0, 3], sizes = [8, 1], strides = [1, 1]} : vector<8x4xf32> to vector<8x1xf32>
    %264 = vector.extract_strided_slice %242 {offsets = [3, 0], sizes = [1, 256], strides = [1, 1]} : vector<4x256xf32> to vector<1x256xf32>
    %265 = vector.broadcast %263 : vector<8x1xf32> to vector<8x256xf32>
    %266 = vector.broadcast %264 : vector<1x256xf32> to vector<8x256xf32>
    %267 = arith.mulf %265, %266 : vector<8x256xf32>
    %268 = arith.addf %262, %267 : vector<8x256xf32>
    %c0_37 = arith.constant 0 : index
    %c0_38 = arith.constant 0 : index
    %c0_39 = arith.constant 0 : index
    %269 = vector.load %arg4[%c0_37, %c0_38, %c0_39] : memref<1x8x256xf32, #tpu.memory_space<vmem>>, vector<1x8x256xf32>
    %270 = vector.shape_cast %269 : vector<1x8x256xf32> to vector<8x256xf32>
    %271 = vector.shape_cast %268 : vector<8x256xf32> to vector<1x8x256xf32>
    tpu.vector_store %arg4[%c0_37, %c0_38, %c0_39], %271 {strides = array<i32>} : memref<1x8x256xf32, #tpu.memory_space<vmem>>, vector<1x8x256xf32>,
    return
  }
  func.func @transform_0(%arg0: i32) -> (i32, i32, i32) {
    %c0_i32 = arith.constant 0 : i32
    %c0_i32_0 = arith.constant 0 : i32
    %c0_i32_1 = arith.constant 0 : i32
    %c0_i32_2 = arith.constant 0 : i32
    return %c0_i32, %c0_i32_0, %c0_i32_1 : i32, i32, i32
  }
  func.func @transform_1(%arg0: i32) -> (i32, i32) {
    %c0_i32 = arith.constant 0 : i32
    %c0_i32_0 = arith.constant 0 : i32
    %c0_i32_1 = arith.constant 0 : i32
    return %c0_i32, %c0_i32_0 : i32, i32
  }
  func.func @transform_2(%arg0: i32) -> (i32, i32, i32) {
    %c0_i32 = arith.constant 0 : i32
    %c0_i32_0 = arith.constant 0 : i32
    %c0_i32_1 = arith.constant 0 : i32
    return %arg0, %c0_i32, %c0_i32_0 : i32, i32, i32
  }
  func.func @transform_3(%arg0: i32) -> (i32, i32, i32) {
    %c0_i32 = arith.constant 0 : i32
    %c0_i32_0 = arith.constant 0 : i32
    %c0_i32_1 = arith.constant 0 : i32
    return %arg0, %c0_i32, %c0_i32_0 : i32, i32, i32
  }
}

</mosaic_0001>

<llo_original>
// kernel: tpu_custom_call.1
$region0: #{tpu_custom_call.1}
  #allocation0 [shape = 'u32[]', space=smem, size = 0x4, offset = 0x4, fixed_abs, tag = 'smem constant byte address 0x4 - core index']
  #allocation1 [shape = 'u32[144,128]{1,0:T(1,128)}', space=vmem, size = 0x12000, scoped, tag = 'internal scratch']
  %s0 = inlined_call_operand.vmem [shape: f32[9,8,4], index: 0, kind: input, shape index: {}]
  %s1 = inlined_call_operand.vmem [shape: f32[9,256], index: 1, kind: input, shape index: {}]
  %s2 = inlined_call_operand.vmem [shape: f32[2,4,256], index: 2, kind: input, shape index: {}]
  %s3 = inlined_call_operand.hbm [shape: f32[2,8,256], index: 3, kind: output, shape index: {}]
  %s4 = sld [smem:[#allocation0]]
  $region45: #{tpu_custom_call.1} parent=0
    _
  %s6 = ssub.s32 1, %s4
  %s7 = scalar_select 0, %s6, %s4
  $region1: #{tpu_custom_call.1} parent=0
    #allocation2 [shape = 'u8[16384]{0}', space=vmem, size = 0x4000, scoped, tag = 'output window, operand 0']
    #allocation3 [shape = 's32[2]{0}', space=sflag, size = 0x8, scoped, tag = 'scoped memory for tpu_custom_call.1']
    %8 = vsyncpa [#allocation3], 0
    %s9 = scalar_lea.sflag [#allocation3], 1
    %10 = vsyncpa %s9, 0
    loop: start=0, step=1, limit=4
    $region2: #{tpu_custom_call.1} parent=1 // loop_pre_header
      _
    $region3: #{tpu_custom_call.1} parent=1 // loop_header
      %s12 = sphi 0, %s16
      %p13 = scmp.ge.s32.totalorder %s12, 4
      %s20 = sphi 0, %s20
      %s22 = sphi 0, %s20
      %s23 = sphi 0, %s22
      %s37 = sphi 0, %s23
      %s41 = sphi 0, %s41
      %s43 = sphi 0, %s41
      %s44 = sphi 0, %s43
      %s58 = sphi 0, %s44
      %s64 = sphi 0, %s66
      %s67 = sphi 0, %s64
      %s68 = sphi 0, %s67
      %s84 = sphi 0, %s68
      %s90 = sphi 0, %s92
      %s93 = sphi 0, %s90
      %s94 = sphi 0, %s93
      %s110 = sphi 0, %s94
    $region4: #{tpu_custom_call.1} parent=1 // loop_header_branch
      %15 = sbr.rel (%p13) target = $region8
    $region5: #{tpu_custom_call.1} parent=1 // loop_body
      %s17 = ssub.s32 %s12, 1
      %s18 = ssub.s32 %s12, 2
      %s19 = sadd.s32 %s12, 1
      %s21 = sadd.s32 %s20, 1
      %p24 = scmp.eq.s32.totalorder %s12, 1
      %p25 = scmp.ne.s32.totalorder %s20, %s22
      %p26 = scmp.eq.s32.totalorder %s12, 0
      %p27 = por %p25, %p26
      %p28 = scmp.ne.s32.totalorder %s20, %s22
      %p29 = scmp.eq.s32.totalorder %s17, 1
      %p30 = por %p28, %p29
      %p31 = scmp.ne.s32.totalorder %s22, %s23
      %p32 = scmp.eq.s32.totalorder %s17, 0
      %p33 = por %p31, %p32
      %p34 = scmp.ne.s32.totalorder %s22, %s23
      %p35 = scmp.eq.s32.totalorder %s18, 1
      %p36 = por %p34, %p35
      %p38 = scmp.ne.s32.totalorder %s23, %s37
      %p39 = scmp.eq.s32.totalorder %s18, 0
      %p40 = por %p38, %p39
      %s42 = sadd.s32 %s41, 1
      %p45 = scmp.eq.s32.totalorder %s12, 1
      %p46 = scmp.ne.s32.totalorder %s41, %s43
      %p47 = scmp.eq.s32.totalorder %s12, 0
      %p48 = por %p46, %p47
      %p49 = scmp.ne.s32.totalorder %s41, %s43
      %p50 = scmp.eq.s32.totalorder %s17, 1
      %p51 = por %p49, %p50
      %p52 = scmp.ne.s32.totalorder %s43, %s44
      %p53 = scmp.eq.s32.totalorder %s17, 0
      %p54 = por %p52, %p53
      %p55 = scmp.ne.s32.totalorder %s43, %s44
      %p56 = scmp.eq.s32.totalorder %s18, 1
      %p57 = por %p55, %p56
      %p59 = scmp.ne.s32.totalorder %s44, %s58
      %p60 = scmp.eq.s32.totalorder %s18, 0
      %p61 = por %p59, %p60
      %s62 = ssub.s32 %s12, %s19
      %p63 = scmp.eq.s32.totalorder %s62, 0
      %s65 = sadd.s32 %s64, 1
      %s66 = scalar_select %p63, %s64, %s65
      %p69 = pneg %p63
      %p70 = scmp.eq.s32.totalorder %s12, 1
      %p71 = por %p69, %p70
      %p72 = scmp.ne.s32.totalorder %s64, %s67
      %p73 = scmp.eq.s32.totalorder %s12, 0
      %p74 = por %p72, %p73
      %p75 = scmp.ne.s32.totalorder %s64, %s67
      %p76 = scmp.eq.s32.totalorder %s17, 1
      %p77 = por %p75, %p76
      %p78 = scmp.ne.s32.totalorder %s67, %s68
      %p79 = scmp.eq.s32.totalorder %s17, 0
      %p80 = por %p78, %p79
      %p81 = scmp.ne.s32.totalorder %s67, %s68
      %p82 = scmp.eq.s32.totalorder %s18, 1
      %p83 = por %p81, %p82
      %p85 = scmp.ne.s32.totalorder %s68, %s84
      %p86 = scmp.eq.s32.totalorder %s18, 0
      %p87 = por %p85, %p86
      %s88 = ssub.s32 %s12, %s19
      %p89 = scmp.eq.s32.totalorder %s88, 0
      %s91 = sadd.s32 %s90, 1
      %s92 = scalar_select %p89, %s90, %s91
      %p95 = pneg %p89
      %p96 = scmp.eq.s32.totalorder %s12, 1
      %p97 = por %p95, %p96
      %p98 = scmp.ne.s32.totalorder %s90, %s93
      %p99 = scmp.eq.s32.totalorder %s12, 0
      %p100 = por %p98, %p99
      %p101 = scmp.ne.s32.totalorder %s90, %s93
      %p102 = scmp.eq.s32.totalorder %s17, 1
      %p103 = por %p101, %p102
      %p104 = scmp.ne.s32.totalorder %s93, %s94
      %p105 = scmp.eq.s32.totalorder %s17, 0
      %p106 = por %p104, %p105
      %p107 = scmp.ne.s32.totalorder %s93, %s94
      %p108 = scmp.eq.s32.totalorder %s18, 1
      %p109 = por %p107, %p108
      %p111 = scmp.ne.s32.totalorder %s94, %s110
      %p112 = scmp.eq.s32.totalorder %s18, 0
      %p113 = por %p111, %p112
      %p114 = scmp.le.s32.totalorder 1, %s12
      %p115 = scmp.lt.s32.totalorder %s12, 3
      %p116 = pnand %p114, %p115
      %p117 = pneg %p116
      // Predicated region
      $region9: #{tpu_custom_call.1} parent=5 // pred_check
        _
      $region10: #{tpu_custom_call.1} parent=5 // pred_check_branch
        %119 = sbr.rel (%p116) target = $region12
      $region11: #{tpu_custom_call.1} parent=5 // pred_region
        %s120 = ssub.s32 %s12, 1
        // Predicated region
        $region13: #{tpu_custom_call.1} parent=11 // pred_check
          %p121 = pneg %p33
        $region14: #{tpu_custom_call.1} parent=11 // pred_check_branch
          %123 = sbr.rel (%p121) target = $region16
        $region15: #{tpu_custom_call.1} parent=11 // pred_region
          _
        $region16: #{tpu_custom_call.1} parent=11 // pred_fallthru
          _
        // Predicated region
        $region17: #{tpu_custom_call.1} parent=11 // pred_check
          %p124 = pneg %p54
        $region18: #{tpu_custom_call.1} parent=11 // pred_check_branch
          %126 = sbr.rel (%p124) target = $region20
        $region19: #{tpu_custom_call.1} parent=11 // pred_region
          _
        $region20: #{tpu_custom_call.1} parent=11 // pred_fallthru
          _
      $region12: #{tpu_custom_call.1} parent=5 // pred_fallthru
        _
      %p127 = scmp.lt.s32.totalorder %s12, 2
      // Predicated region
      $region21: #{tpu_custom_call.1} parent=5 // pred_check
        %p128 = pneg %p127
      $region22: #{tpu_custom_call.1} parent=5 // pred_check_branch
        %130 = sbr.rel (%p128) target = $region24
      $region23: #{tpu_custom_call.1} parent=5 // pred_region
        // Predicated region
        $region25: #{tpu_custom_call.1} parent=23 // pred_check
          %p131 = pneg %p74
        $region26: #{tpu_custom_call.1} parent=23 // pred_check_branch
          %133 = sbr.rel (%p131) target = $region28
        $region27: #{tpu_custom_call.1} parent=23 // pred_region
          %p134 = scmp.lt.s32.totalorder %s12, 1
          %s135 = scalar_select %p134, %s12, 1
          %s136 = smul.addr %s135, 2
          %s137 = smul.addr %s136, 4
          %s138 = scalar_lea.vmem %s2, %s137
        $region28: #{tpu_custom_call.1} parent=23 // pred_fallthru
          _
      $region24: #{tpu_custom_call.1} parent=5 // pred_fallthru
        _
      %p139 = scmp.le.s32.totalorder 1, %s12
      %p140 = scmp.lt.s32.totalorder %s12, 3
      %p141 = pnand %p139, %p140
      %p142 = pneg %p141
      // Predicated region
      $region29: #{tpu_custom_call.1} parent=5 // pred_check
        _
      $region30: #{tpu_custom_call.1} parent=5 // pred_check_branch
        %144 = sbr.rel (%p141) target = $region32
      $region31: #{tpu_custom_call.1} parent=5 // pred_region
        %s145 = ssub.s32 %s12, 1
        %p146 = pneg %p33
        %p147 = pneg %p30
        %p148 = pneg %p54
        %p149 = pneg %p51
        %p150 = scmp.lt.s32.totalorder %s17, 1
        %s151 = scalar_select %p150, %s17, 1
        %s152 = smul.addr %s151, 2
        %s153 = smul.addr %s152, 4
        %s154 = scalar_lea.vmem %s2, %s153
        %p155 = pneg %p80
        %p156 = pneg %p77
        %p157 = pneg %p106
        %p158 = pneg %p103
        %s159 = sand.u32 %s93, 1
        %s160 = scalar_lea.sflag [#allocation3], %s159
        %s161 = sand.u32 %s93, 1
        %s162 = smul.addr %s161, 16
        %s163 = scalar_lea.vmem [#allocation2], %s162
        %p164 = scmp.lt.s32.totalorder %s17, 1
        %s165 = scalar_select %p164, %s17, 1
        %s166 = smul.addr %s165, 2
        %s167 = smul.addr %s166, 4
        %s168 = scalar_lea.vmem %s2, %s167
        %v169 = vld [vmem:[%s168] sm:$0xff]
        %v171 = vcombine.high %v169, %v169
        %173 = vrot.lane.b32.xlu0 %v169, 17
        %v174 = vpop.permute.xlu0 %173
        %175 = vrot.lane.b32.xlu0 %v171, 17
        %v176 = vpop.permute.xlu0 %175
        %v177 = vlaneseq
        %v178 = vand.u32 %v177, 127
        %vm179 = vcmp.lt.s32.totalorder %v178, 17
        %v180 = vsel %vm179, %v174, %v176
        %v181 = vsel %vm179, %v176, %v174
        %v182 = vld [vmem:[%s1] ss:$8 sm:$0x3]
        %v184 = vlaneseq
        %v185 = vshrl.u32 %v184, 7
        %v186 = vsub.s32 0, %v185
        %v187 = vrot.slane %v182, %v186
        %v188 = vlaneseq
        %v189 = vshrl.u32 %v188, 7
        %v190 = vsub.s32 1, %v189
        %v191 = vrot.slane %v182, %v190
        %v194 = vmul.f32 %v181, %v187
        %v195 = vmul.f32 %v180, %v191
        %v196 = vld [vmem:[%s0] sm:$0xff]
        %198 = vset.pattern.permute.xlu0 0
        %199 = vperm.xlu0 %198, %v196
        %v200 = vpop.permute.xlu0 %199
        %v202 = vlaneseq
        %v203 = vshrl.u32 %v202, 7
        %v204 = vsub.s32 0, %v203
        %v205 = vrot.slane %v194, %v204
        %v206 = vlaneseq
        %v207 = vshrl.u32 %v206, 7
        %v208 = vsub.s32 0, %v207
        %v209 = vrot.slane %v195, %v208
        %v210 = vmul.f32 %v200, %v205
        %v211 = vmul.f32 %v200, %v209
        %v212 = vadd.f32 %v210, 0.0
        %v213 = vadd.f32 %v211, 0.0
        %214 = vset.pattern.permute.xlu0 1
        %215 = vperm.xlu0 %214, %v196
        %v216 = vpop.permute.xlu0 %215
        %v218 = vlaneseq
        %v219 = vshrl.u32 %v218, 7
        %v220 = vsub.s32 1, %v219
        %v221 = vrot.slane %v194, %v220
        %v222 = vlaneseq
        %v223 = vshrl.u32 %v222, 7
        %v224 = vsub.s32 1, %v223
        %v225 = vrot.slane %v195, %v224
        %v226 = vmul.f32 %v216, %v221
        %v227 = vmul.f32 %v216, %v225
        %v228 = vadd.f32 %v212, %v226
        %v229 = vadd.f32 %v213, %v227
        %230 = vset.pattern.permute.xlu0 2
        %231 = vperm.xlu0 %230, %v196
        %v232 = vpop.permute.xlu0 %231
        %v234 = vlaneseq
        %v235 = vshrl.u32 %v234, 7
        %v236 = vsub.s32 2, %v235
        %v237 = vrot.slane %v194, %v236
        %v238 = vlaneseq
        %v239 = vshrl.u32 %v238, 7
        %v240 = vsub.s32 2, %v239
        %v241 = vrot.slane %v195, %v240
        %v242 = vmul.f32 %v232, %v237
        %v243 = vmul.f32 %v232, %v241
        %v244 = vadd.f32 %v228, %v242
        %v245 = vadd.f32 %v229, %v243
        %246 = vset.pattern.permute.xlu0 3
        %247 = vperm.xlu0 %246, %v196
        %v248 = vpop.permute.xlu0 %247
        %v250 = vlaneseq
        %v251 = vshrl.u32 %v250, 7
        %v252 = vsub.s32 3, %v251
        %v253 = vrot.slane %v194, %v252
        %v254 = vlaneseq
        %v255 = vshrl.u32 %v254, 7
        %v256 = vsub.s32 3, %v255
        %v257 = vrot.slane %v195, %v256
        %v258 = vmul.f32 %v248, %v253
        %v259 = vmul.f32 %v248, %v257
        %v260 = vadd.f32 %v244, %v258
        %v261 = vadd.f32 %v245, %v259
        %262 = vrot.lane.b32.xlu0 %v169, 16
        %v263 = vpop.permute.xlu0 %262
        %264 = vrot.lane.b32.xlu0 %v171, 16
        %v265 = vpop.permute.xlu0 %264
        %vm266 = vcmp.lt.s32.totalorder %v178, 16
        %v267 = vsel %vm266, %v263, %v265
        %v268 = vsel %vm266, %v265, %v263
        %s269 = scalar_lea.vmem %s1, 1
        %v270 = vld [vmem:[%s269] ss:$8 sm:$0x3]
        %v272 = vlaneseq
        %v273 = vshrl.u32 %v272, 7
        %v274 = vsub.s32 0, %v273
        %v275 = vrot.slane %v270, %v274
        %v276 = vlaneseq
        %v277 = vshrl.u32 %v276, 7
        %v278 = vsub.s32 1, %v277
        %v279 = vrot.slane %v270, %v278
        %v282 = vmul.f32 %v268, %v275
        %v283 = vmul.f32 %v267, %v279
        %s284 = scalar_lea.vmem %s0, 8
        %v285 = vld [vmem:[%s284] sm:$0xff]
        %287 = vset.pattern.permute.xlu0 0
        %288 = vperm.xlu0 %287, %v285
        %v289 = vpop.permute.xlu0 %288
        %v291 = vlaneseq
        %v292 = vshrl.u32 %v291, 7
        %v293 = vsub.s32 0, %v292
        %v294 = vrot.slane %v282, %v293
        %v295 = vlaneseq
        %v296 = vshrl.u32 %v295, 7
        %v297 = vsub.s32 0, %v296
        %v298 = vrot.slane %v283, %v297
        %v299 = vmul.f32 %v289, %v294
        %v300 = vmul.f32 %v289, %v298
        %v301 = vadd.f32 %v260, %v299
        %v302 = vadd.f32 %v261, %v300
        %303 = vset.pattern.permute.xlu0 1
        %304 = vperm.xlu0 %303, %v285
        %v305 = vpop.permute.xlu0 %304
        %v307 = vlaneseq
        %v308 = vshrl.u32 %v307, 7
        %v309 = vsub.s32 1, %v308
        %v310 = vrot.slane %v282, %v309
        %v311 = vlaneseq
        %v312 = vshrl.u32 %v311, 7
        %v313 = vsub.s32 1, %v312
        %v314 = vrot.slane %v283, %v313
        %v315 = vmul.f32 %v305, %v310
        %v316 = vmul.f32 %v305, %v314
        %v317 = vadd.f32 %v301, %v315
        %v318 = vadd.f32 %v302, %v316
        %319 = vset.pattern.permute.xlu0 2
        %320 = vperm.xlu0 %319, %v285
        %v321 = vpop.permute.xlu0 %320
        %v323 = vlaneseq
        %v324 = vshrl.u32 %v323, 7
        %v325 = vsub.s32 2, %v324
        %v326 = vrot.slane %v282, %v325
        %v327 = vlaneseq
        %v328 = vshrl.u32 %v327, 7
        %v329 = vsub.s32 2, %v328
        %v330 = vrot.slane %v283, %v329
        %v331 = vmul.f32 %v321, %v326
        %v332 = vmul.f32 %v321, %v330
        %v333 = vadd.f32 %v317, %v331
        %v334 = vadd.f32 %v318, %v332
        %335 = vset.pattern.permute.xlu0 3
        %336 = vperm.xlu0 %335, %v285
        %v337 = vpop.permute.xlu0 %336
        %v339 = vlaneseq
        %v340 = vshrl.u32 %v339, 7
        %v341 = vsub.s32 3, %v340
        %v342 = vrot.slane %v282, %v341
        %v343 = vlaneseq
        %v344 = vshrl.u32 %v343, 7
        %v345 = vsub.s32 3, %v344
        %v346 = vrot.slane %v283, %v345
        %v347 = vmul.f32 %v337, %v342
        %v348 = vmul.f32 %v337, %v346
        %v349 = vadd.f32 %v333, %v347
        %v350 = vadd.f32 %v334, %v348
        %351 = vrot.lane.b32.xlu0 %v169, 15
        %v352 = vpop.permute.xlu0 %351
        %353 = vrot.lane.b32.xlu0 %v171, 15
        %v354 = vpop.permute.xlu0 %353
        %vm355 = vcmp.lt.s32.totalorder %v178, 15
        %v356 = vsel %vm355, %v352, %v354
        %v357 = vsel %vm355, %v354, %v352
        %s358 = scalar_lea.vmem %s1, 2
        %v359 = vld [vmem:[%s358] ss:$8 sm:$0x3]
        %v361 = vlaneseq
        %v362 = vshrl.u32 %v361, 7
        %v363 = vsub.s32 0, %v362
        %v364 = vrot.slane %v359, %v363
        %v365 = vlaneseq
        %v366 = vshrl.u32 %v365, 7
        %v367 = vsub.s32 1, %v366
        %v368 = vrot.slane %v359, %v367
        %v371 = vmul.f32 %v357, %v364
        %v372 = vmul.f32 %v356, %v368
        %s373 = scalar_lea.vmem %s0, 16
        %v374 = vld [vmem:[%s373] sm:$0xff]
        %376 = vset.pattern.permute.xlu0 0
        %377 = vperm.xlu0 %376, %v374
        %v378 = vpop.permute.xlu0 %377
        %v380 = vlaneseq
        %v381 = vshrl.u32 %v380, 7
        %v382 = vsub.s32 0, %v381
        %v383 = vrot.slane %v371, %v382
        %v384 = vlaneseq
        %v385 = vshrl.u32 %v384, 7
        %v386 = vsub.s32 0, %v385
        %v387 = vrot.slane %v372, %v386
        %v388 = vmul.f32 %v378, %v383
        %v389 = vmul.f32 %v378, %v387
        %v390 = vadd.f32 %v349, %v388
        %v391 = vadd.f32 %v350, %v389
        %392 = vset.pattern.permute.xlu0 1
        %393 = vperm.xlu0 %392, %v374
        %v394 = vpop.permute.xlu0 %393
        %v396 = vlaneseq
        %v397 = vshrl.u32 %v396, 7
        %v398 = vsub.s32 1, %v397
        %v399 = vrot.slane %v371, %v398
        %v400 = vlaneseq
        %v401 = vshrl.u32 %v400, 7
        %v402 = vsub.s32 1, %v401
        %v403 = vrot.slane %v372, %v402
        %v404 = vmul.f32 %v394, %v399
        %v405 = vmul.f32 %v394, %v403
        %v406 = vadd.f32 %v390, %v404
        %v407 = vadd.f32 %v391, %v405
        %408 = vset.pattern.permute.xlu0 2
        %409 = vperm.xlu0 %408, %v374
        %v410 = vpop.permute.xlu0 %409
        %v412 = vlaneseq
        %v413 = vshrl.u32 %v412, 7
        %v414 = vsub.s32 2, %v413
        %v415 = vrot.slane %v371, %v414
        %v416 = vlaneseq
        %v417 = vshrl.u32 %v416, 7
        %v418 = vsub.s32 2, %v417
        %v419 = vrot.slane %v372, %v418
        %v420 = vmul.f32 %v410, %v415
        %v421 = vmul.f32 %v410, %v419
        %v422 = vadd.f32 %v406, %v420
        %v423 = vadd.f32 %v407, %v421
        %424 = vset.pattern.permute.xlu0 3
        %425 = vperm.xlu0 %424, %v374
        %v426 = vpop.permute.xlu0 %425
        %v428 = vlaneseq
        %v429 = vshrl.u32 %v428, 7
        %v430 = vsub.s32 3, %v429
        %v431 = vrot.slane %v371, %v430
        %v432 = vlaneseq
        %v433 = vshrl.u32 %v432, 7
        %v434 = vsub.s32 3, %v433
        %v435 = vrot.slane %v372, %v434
        %v436 = vmul.f32 %v426, %v431
        %v437 = vmul.f32 %v426, %v435
        %v438 = vadd.f32 %v422, %v436
        %v439 = vadd.f32 %v423, %v437
        %440 = vrot.lane.b32.xlu0 %v169, 1
        %v441 = vpop.permute.xlu0 %440
        %442 = vrot.lane.b32.xlu0 %v171, 1
        %v443 = vpop.permute.xlu0 %442
        %vm444 = vcmp.lt.s32.totalorder %v178, 1
        %v445 = vsel %vm444, %v441, %v443
        %v446 = vsel %vm444, %v443, %v441
        %s447 = scalar_lea.vmem %s1, 3
        %v448 = vld [vmem:[%s447] ss:$8 sm:$0x3]
        %v450 = vlaneseq
        %v451 = vshrl.u32 %v450, 7
        %v452 = vsub.s32 0, %v451
        %v453 = vrot.slane %v448, %v452
        %v454 = vlaneseq
        %v455 = vshrl.u32 %v454, 7
        %v456 = vsub.s32 1, %v455
        %v457 = vrot.slane %v448, %v456
        %v460 = vmul.f32 %v446, %v453
        %v461 = vmul.f32 %v445, %v457
        %s462 = scalar_lea.vmem %s0, 24
        %v463 = vld [vmem:[%s462] sm:$0xff]
        %465 = vset.pattern.permute.xlu0 0
        %466 = vperm.xlu0 %465, %v463
        %v467 = vpop.permute.xlu0 %466
        %v469 = vlaneseq
        %v470 = vshrl.u32 %v469, 7
        %v471 = vsub.s32 0, %v470
        %v472 = vrot.slane %v460, %v471
        %v473 = vlaneseq
        %v474 = vshrl.u32 %v473, 7
        %v475 = vsub.s32 0, %v474
        %v476 = vrot.slane %v461, %v475
        %v477 = vmul.f32 %v467, %v472
        %v478 = vmul.f32 %v467, %v476
        %v479 = vadd.f32 %v438, %v477
        %v480 = vadd.f32 %v439, %v478
        %481 = vset.pattern.permute.xlu0 1
        %482 = vperm.xlu0 %481, %v463
        %v483 = vpop.permute.xlu0 %482
        %v485 = vlaneseq
        %v486 = vshrl.u32 %v485, 7
        %v487 = vsub.s32 1, %v486
        %v488 = vrot.slane %v460, %v487
        %v489 = vlaneseq
        %v490 = vshrl.u32 %v489, 7
        %v491 = vsub.s32 1, %v490
        %v492 = vrot.slane %v461, %v491
        %v493 = vmul.f32 %v483, %v488
        %v494 = vmul.f32 %v483, %v492
        %v495 = vadd.f32 %v479, %v493
        %v496 = vadd.f32 %v480, %v494
        %497 = vset.pattern.permute.xlu0 2
        %498 = vperm.xlu0 %497, %v463
        %v499 = vpop.permute.xlu0 %498
        %v501 = vlaneseq
        %v502 = vshrl.u32 %v501, 7
        %v503 = vsub.s32 2, %v502
        %v504 = vrot.slane %v460, %v503
        %v505 = vlaneseq
        %v506 = vshrl.u32 %v505, 7
        %v507 = vsub.s32 2, %v506
        %v508 = vrot.slane %v461, %v507
        %v509 = vmul.f32 %v499, %v504
        %v510 = vmul.f32 %v499, %v508
        %v511 = vadd.f32 %v495, %v509
        %v512 = vadd.f32 %v496, %v510
        %513 = vset.pattern.permute.xlu0 3
        %514 = vperm.xlu0 %513, %v463
        %v515 = vpop.permute.xlu0 %514
        %v517 = vlaneseq
        %v518 = vshrl.u32 %v517, 7
        %v519 = vsub.s32 3, %v518
        %v520 = vrot.slane %v460, %v519
        %v521 = vlaneseq
        %v522 = vshrl.u32 %v521, 7
        %v523 = vsub.s32 3, %v522
        %v524 = vrot.slane %v461, %v523
        %v525 = vmul.f32 %v515, %v520
        %v526 = vmul.f32 %v515, %v524
        %v527 = vadd.f32 %v511, %v525
        %v528 = vadd.f32 %v512, %v526
        %s529 = scalar_lea.vmem %s0, 32
        %v530 = vld [vmem:[%s529] sm:$0xff]
        %532 = vset.pattern.permute.xlu0 0
        %533 = vperm.xlu0 %532, %v530
        %v534 = vpop.permute.xlu0 %533
        %v536 = vlaneseq
        %v537 = vshrl.u32 %v536, 7
        %v538 = vsub.s32 0, %v537
        %v539 = vrot.slane %v169, %v538
        %v540 = vlaneseq
        %v541 = vshrl.u32 %v540, 7
        %v542 = vsub.s32 4, %v541
        %v543 = vrot.slane %v169, %v542
        %v546 = vlaneseq
        %v547 = vshrl.u32 %v546, 7
        %v548 = vsub.s32 0, %v547
        %v549 = vrot.slane %v539, %v548
        %v550 = vlaneseq
        %v551 = vshrl.u32 %v550, 7
        %v552 = vsub.s32 0, %v551
        %v553 = vrot.slane %v543, %v552
        %v554 = vmul.f32 %v534, %v549
        %v555 = vmul.f32 %v534, %v553
        %v556 = vadd.f32 %v527, %v554
        %v557 = vadd.f32 %v528, %v555
        %558 = vset.pattern.permute.xlu0 1
        %559 = vperm.xlu0 %558, %v530
        %v560 = vpop.permute.xlu0 %559
        %v562 = vlaneseq
        %v563 = vshrl.u32 %v562, 7
        %v564 = vsub.s32 1, %v563
        %v565 = vrot.slane %v169, %v564
        %v566 = vlaneseq
        %v567 = vshrl.u32 %v566, 7
        %v568 = vsub.s32 5, %v567
        %v569 = vrot.slane %v169, %v568
        %v572 = vlaneseq
        %v573 = vshrl.u32 %v572, 7
        %v574 = vsub.s32 1, %v573
        %v575 = vrot.slane %v565, %v574
        %v576 = vlaneseq
        %v577 = vshrl.u32 %v576, 7
        %v578 = vsub.s32 1, %v577
        %v579 = vrot.slane %v569, %v578
        %v580 = vmul.f32 %v560, %v575
        %v581 = vmul.f32 %v560, %v579
        %v582 = vadd.f32 %v556, %v580
        %v583 = vadd.f32 %v557, %v581
        %584 = vset.pattern.permute.xlu0 2
        %585 = vperm.xlu0 %584, %v530
        %v586 = vpop.permute.xlu0 %585
        %v588 = vlaneseq
        %v589 = vshrl.u32 %v588, 7
        %v590 = vsub.s32 2, %v589
        %v591 = vrot.slane %v169, %v590
        %v592 = vlaneseq
        %v593 = vshrl.u32 %v592, 7
        %v594 = vsub.s32 6, %v593
        %v595 = vrot.slane %v169, %v594
        %v598 = vlaneseq
        %v599 = vshrl.u32 %v598, 7
        %v600 = vsub.s32 2, %v599
        %v601 = vrot.slane %v591, %v600
        %v602 = vlaneseq
        %v603 = vshrl.u32 %v602, 7
        %v604 = vsub.s32 2, %v603
        %v605 = vrot.slane %v595, %v604
        %v606 = vmul.f32 %v586, %v601
        %v607 = vmul.f32 %v586, %v605
        %v608 = vadd.f32 %v582, %v606
        %v609 = vadd.f32 %v583, %v607
        %610 = vset.pattern.permute.xlu0 3
        %611 = vperm.xlu0 %610, %v530
        %v612 = vpop.permute.xlu0 %611
        %v614 = vlaneseq
        %v615 = vshrl.u32 %v614, 7
        %v616 = vsub.s32 3, %v615
        %v617 = vrot.slane %v169, %v616
        %v618 = vlaneseq
        %v619 = vshrl.u32 %v618, 7
        %v620 = vsub.s32 7, %v619
        %v621 = vrot.slane %v169, %v620
        %v624 = vlaneseq
        %v625 = vshrl.u32 %v624, 7
        %v626 = vsub.s32 3, %v625
        %v627 = vrot.slane %v617, %v626
        %v628 = vlaneseq
        %v629 = vshrl.u32 %v628, 7
        %v630 = vsub.s32 3, %v629
        %v631 = vrot.slane %v621, %v630
        %v632 = vmul.f32 %v612, %v627
        %v633 = vmul.f32 %v612, %v631
        %v634 = vadd.f32 %v608, %v632
        %v635 = vadd.f32 %v609, %v633
        %636 = vrot.lane.b32.xlu0 %v169, 127
        %v637 = vpop.permute.xlu0 %636
        %638 = vrot.lane.b32.xlu0 %v171, 127
        %v639 = vpop.permute.xlu0 %638
        %vm640 = vcmp.lt.s32.totalorder %v178, 127
        %v641 = vsel %vm640, %v637, %v639
        %v642 = vsel %vm640, %v639, %v637
        %s643 = scalar_lea.vmem %s1, 5
        %v644 = vld [vmem:[%s643] ss:$8 sm:$0x3]
        %v646 = vlaneseq
        %v647 = vshrl.u32 %v646, 7
        %v648 = vsub.s32 0, %v647
        %v649 = vrot.slane %v644, %v648
        %v650 = vlaneseq
        %v651 = vshrl.u32 %v650, 7
        %v652 = vsub.s32 1, %v651
        %v653 = vrot.slane %v644, %v652
        %v656 = vmul.f32 %v641, %v649
        %v657 = vmul.f32 %v642, %v653
        %s658 = scalar_lea.vmem %s0, 40
        %v659 = vld [vmem:[%s658] sm:$0xff]
        %661 = vset.pattern.permute.xlu0 0
        %662 = vperm.xlu0 %661, %v659
        %v663 = vpop.permute.xlu0 %662
        %v665 = vlaneseq
        %v666 = vshrl.u32 %v665, 7
        %v667 = vsub.s32 0, %v666
        %v668 = vrot.slane %v656, %v667
        %v669 = vlaneseq
        %v670 = vshrl.u32 %v669, 7
        %v671 = vsub.s32 0, %v670
        %v672 = vrot.slane %v657, %v671
        %v673 = vmul.f32 %v663, %v668
        %v674 = vmul.f32 %v663, %v672
        %v675 = vadd.f32 %v634, %v673
        %v676 = vadd.f32 %v635, %v674
        %677 = vset.pattern.permute.xlu0 1
        %678 = vperm.xlu0 %677, %v659
        %v679 = vpop.permute.xlu0 %678
        %v681 = vlaneseq
        %v682 = vshrl.u32 %v681, 7
        %v683 = vsub.s32 1, %v682
        %v684 = vrot.slane %v656, %v683
        %v685 = vlaneseq
        %v686 = vshrl.u32 %v685, 7
        %v687 = vsub.s32 1, %v686
        %v688 = vrot.slane %v657, %v687
        %v689 = vmul.f32 %v679, %v684
        %v690 = vmul.f32 %v679, %v688
        %v691 = vadd.f32 %v675, %v689
        %v692 = vadd.f32 %v676, %v690
        %693 = vset.pattern.permute.xlu0 2
        %694 = vperm.xlu0 %693, %v659
        %v695 = vpop.permute.xlu0 %694
        %v697 = vlaneseq
        %v698 = vshrl.u32 %v697, 7
        %v699 = vsub.s32 2, %v698
        %v700 = vrot.slane %v656, %v699
        %v701 = vlaneseq
        %v702 = vshrl.u32 %v701, 7
        %v703 = vsub.s32 2, %v702
        %v704 = vrot.slane %v657, %v703
        %v705 = vmul.f32 %v695, %v700
        %v706 = vmul.f32 %v695, %v704
        %v707 = vadd.f32 %v691, %v705
        %v708 = vadd.f32 %v692, %v706
        %709 = vset.pattern.permute.xlu0 3
        %710 = vperm.xlu0 %709, %v659
        %v711 = vpop.permute.xlu0 %710
        %v713 = vlaneseq
        %v714 = vshrl.u32 %v713, 7
        %v715 = vsub.s32 3, %v714
        %v716 = vrot.slane %v656, %v715
        %v717 = vlaneseq
        %v718 = vshrl.u32 %v717, 7
        %v719 = vsub.s32 3, %v718
        %v720 = vrot.slane %v657, %v719
        %v721 = vmul.f32 %v711, %v716
        %v722 = vmul.f32 %v711, %v720
        %v723 = vadd.f32 %v707, %v721
        %v724 = vadd.f32 %v708, %v722
        %725 = vrot.lane.b32.xlu0 %v169, 113
        %v726 = vpop.permute.xlu0 %725
        %727 = vrot.lane.b32.xlu0 %v171, 113
        %v728 = vpop.permute.xlu0 %727
        %vm729 = vcmp.lt.s32.totalorder %v178, 113
        %v730 = vsel %vm729, %v726, %v728
        %v731 = vsel %vm729, %v728, %v726
        %s732 = scalar_lea.vmem %s1, 6
        %v733 = vld [vmem:[%s732] ss:$8 sm:$0x3]
        %v735 = vlaneseq
        %v736 = vshrl.u32 %v735, 7
        %v737 = vsub.s32 0, %v736
        %v738 = vrot.slane %v733, %v737
        %v739 = vlaneseq
        %v740 = vshrl.u32 %v739, 7
        %v741 = vsub.s32 1, %v740
        %v742 = vrot.slane %v733, %v741
        %v745 = vmul.f32 %v730, %v738
        %v746 = vmul.f32 %v731, %v742
        %s747 = scalar_lea.vmem %s0, 48
        %v748 = vld [vmem:[%s747] sm:$0xff]
        %750 = vset.pattern.permute.xlu0 0
        %751 = vperm.xlu0 %750, %v748
        %v752 = vpop.permute.xlu0 %751
        %v754 = vlaneseq
        %v755 = vshrl.u32 %v754, 7
        %v756 = vsub.s32 0, %v755
        %v757 = vrot.slane %v745, %v756
        %v758 = vlaneseq
        %v759 = vshrl.u32 %v758, 7
        %v760 = vsub.s32 0, %v759
        %v761 = vrot.slane %v746, %v760
        %v762 = vmul.f32 %v752, %v757
        %v763 = vmul.f32 %v752, %v761
        %v764 = vadd.f32 %v723, %v762
        %v765 = vadd.f32 %v724, %v763
        %766 = vset.pattern.permute.xlu0 1
        %767 = vperm.xlu0 %766, %v748
        %v768 = vpop.permute.xlu0 %767
        %v770 = vlaneseq
        %v771 = vshrl.u32 %v770, 7
        %v772 = vsub.s32 1, %v771
        %v773 = vrot.slane %v745, %v772
        %v774 = vlaneseq
        %v775 = vshrl.u32 %v774, 7
        %v776 = vsub.s32 1, %v775
        %v777 = vrot.slane %v746, %v776
        %v778 = vmul.f32 %v768, %v773
        %v779 = vmul.f32 %v768, %v777
        %v780 = vadd.f32 %v764, %v778
        %v781 = vadd.f32 %v765, %v779
        %782 = vset.pattern.permute.xlu0 2
        %783 = vperm.xlu0 %782, %v748
        %v784 = vpop.permute.xlu0 %783
        %v786 = vlaneseq
        %v787 = vshrl.u32 %v786, 7
        %v788 = vsub.s32 2, %v787
        %v789 = vrot.slane %v745, %v788
        %v790 = vlaneseq
        %v791 = vshrl.u32 %v790, 7
        %v792 = vsub.s32 2, %v791
        %v793 = vrot.slane %v746, %v792
        %v794 = vmul.f32 %v784, %v789
        %v795 = vmul.f32 %v784, %v793
        %v796 = vadd.f32 %v780, %v794
        %v797 = vadd.f32 %v781, %v795
        %798 = vset.pattern.permute.xlu0 3
        %799 = vperm.xlu0 %798, %v748
        %v800 = vpop.permute.xlu0 %799
        %v802 = vlaneseq
        %v803 = vshrl.u32 %v802, 7
        %v804 = vsub.s32 3, %v803
        %v805 = vrot.slane %v745, %v804
        %v806 = vlaneseq
        %v807 = vshrl.u32 %v806, 7
        %v808 = vsub.s32 3, %v807
        %v809 = vrot.slane %v746, %v808
        %v810 = vmul.f32 %v800, %v805
        %v811 = vmul.f32 %v800, %v809
        %v812 = vadd.f32 %v796, %v810
        %v813 = vadd.f32 %v797, %v811
        %814 = vrot.lane.b32.xlu0 %v169, 112
        %v815 = vpop.permute.xlu0 %814
        %816 = vrot.lane.b32.xlu0 %v171, 112
        %v817 = vpop.permute.xlu0 %816
        %vm818 = vcmp.lt.s32.totalorder %v178, 112
        %v819 = vsel %vm818, %v815, %v817
        %v820 = vsel %vm818, %v817, %v815
        %s821 = scalar_lea.vmem %s1, 7
        %v822 = vld [vmem:[%s821] ss:$8 sm:$0x3]
        %v824 = vlaneseq
        %v825 = vshrl.u32 %v824, 7
        %v826 = vsub.s32 0, %v825
        %v827 = vrot.slane %v822, %v826
        %v828 = vlaneseq
        %v829 = vshrl.u32 %v828, 7
        %v830 = vsub.s32 1, %v829
        %v831 = vrot.slane %v822, %v830
        %v834 = vmul.f32 %v819, %v827
        %v835 = vmul.f32 %v820, %v831
        %s836 = scalar_lea.vmem %s0, 56
        %v837 = vld [vmem:[%s836] sm:$0xff]
        %839 = vset.pattern.permute.xlu0 0
        %840 = vperm.xlu0 %839, %v837
        %v841 = vpop.permute.xlu0 %840
        %v843 = vlaneseq
        %v844 = vshrl.u32 %v843, 7
        %v845 = vsub.s32 0, %v844
        %v846 = vrot.slane %v834, %v845
        %v847 = vlaneseq
        %v848 = vshrl.u32 %v847, 7
        %v849 = vsub.s32 0, %v848
        %v850 = vrot.slane %v835, %v849
        %v851 = vmul.f32 %v841, %v846
        %v852 = vmul.f32 %v841, %v850
        %v853 = vadd.f32 %v812, %v851
        %v854 = vadd.f32 %v813, %v852
        %855 = vset.pattern.permute.xlu0 1
        %856 = vperm.xlu0 %855, %v837
        %v857 = vpop.permute.xlu0 %856
        %v859 = vlaneseq
        %v860 = vshrl.u32 %v859, 7
        %v861 = vsub.s32 1, %v860
        %v862 = vrot.slane %v834, %v861
        %v863 = vlaneseq
        %v864 = vshrl.u32 %v863, 7
        %v865 = vsub.s32 1, %v864
        %v866 = vrot.slane %v835, %v865
        %v867 = vmul.f32 %v857, %v862
        %v868 = vmul.f32 %v857, %v866
        %v869 = vadd.f32 %v853, %v867
        %v870 = vadd.f32 %v854, %v868
        %871 = vset.pattern.permute.xlu0 2
        %872 = vperm.xlu0 %871, %v837
        %v873 = vpop.permute.xlu0 %872
        %v875 = vlaneseq
        %v876 = vshrl.u32 %v875, 7
        %v877 = vsub.s32 2, %v876
        %v878 = vrot.slane %v834, %v877
        %v879 = vlaneseq
        %v880 = vshrl.u32 %v879, 7
        %v881 = vsub.s32 2, %v880
        %v882 = vrot.slane %v835, %v881
        %v883 = vmul.f32 %v873, %v878
        %v884 = vmul.f32 %v873, %v882
        %v885 = vadd.f32 %v869, %v883
        %v886 = vadd.f32 %v870, %v884
        %887 = vset.pattern.permute.xlu0 3
        %888 = vperm.xlu0 %887, %v837
        %v889 = vpop.permute.xlu0 %888
        %v891 = vlaneseq
        %v892 = vshrl.u32 %v891, 7
        %v893 = vsub.s32 3, %v892
        %v894 = vrot.slane %v834, %v893
        %v895 = vlaneseq
        %v896 = vshrl.u32 %v895, 7
        %v897 = vsub.s32 3, %v896
        %v898 = vrot.slane %v835, %v897
        %v899 = vmul.f32 %v889, %v894
        %v900 = vmul.f32 %v889, %v898
        %v901 = vadd.f32 %v885, %v899
        %v902 = vadd.f32 %v886, %v900
        %903 = vrot.lane.b32.xlu0 %v169, 111
        %v904 = vpop.permute.xlu0 %903
        %905 = vrot.lane.b32.xlu0 %v171, 111
        %v906 = vpop.permute.xlu0 %905
        %vm907 = vcmp.lt.s32.totalorder %v178, 111
        %v908 = vsel %vm907, %v904, %v906
        %v909 = vsel %vm907, %v906, %v904
        %s910 = scalar_lea.vmem %s1, 16
        %v911 = vld [vmem:[%s910] ss:$8 sm:$0x3]
        %v913 = vlaneseq
        %v914 = vshrl.u32 %v913, 7
        %v915 = vsub.s32 0, %v914
        %v916 = vrot.slane %v911, %v915
        %v917 = vlaneseq
        %v918 = vshrl.u32 %v917, 7
        %v919 = vsub.s32 1, %v918
        %v920 = vrot.slane %v911, %v919
        %v923 = vmul.f32 %v908, %v916
        %v924 = vmul.f32 %v909, %v920
        %s925 = scalar_lea.vmem %s0, 64
        %v926 = vld [vmem:[%s925] sm:$0xff]
        %928 = vset.pattern.permute.xlu0 0
        %929 = vperm.xlu0 %928, %v926
        %v930 = vpop.permute.xlu0 %929
        %v932 = vlaneseq
        %v933 = vshrl.u32 %v932, 7
        %v934 = vsub.s32 0, %v933
        %v935 = vrot.slane %v923, %v934
        %v936 = vlaneseq
        %v937 = vshrl.u32 %v936, 7
        %v938 = vsub.s32 0, %v937
        %v939 = vrot.slane %v924, %v938
        %v940 = vmul.f32 %v930, %v935
        %v941 = vmul.f32 %v930, %v939
        %v942 = vadd.f32 %v901, %v940
        %v943 = vadd.f32 %v902, %v941
        %944 = vset.pattern.permute.xlu0 1
        %945 = vperm.xlu0 %944, %v926
        %v946 = vpop.permute.xlu0 %945
        %v948 = vlaneseq
        %v949 = vshrl.u32 %v948, 7
        %v950 = vsub.s32 1, %v949
        %v951 = vrot.slane %v923, %v950
        %v952 = vlaneseq
        %v953 = vshrl.u32 %v952, 7
        %v954 = vsub.s32 1, %v953
        %v955 = vrot.slane %v924, %v954
        %v956 = vmul.f32 %v946, %v951
        %v957 = vmul.f32 %v946, %v955
        %v958 = vadd.f32 %v942, %v956
        %v959 = vadd.f32 %v943, %v957
        %960 = vset.pattern.permute.xlu0 2
        %961 = vperm.xlu0 %960, %v926
        %v962 = vpop.permute.xlu0 %961
        %v964 = vlaneseq
        %v965 = vshrl.u32 %v964, 7
        %v966 = vsub.s32 2, %v965
        %v967 = vrot.slane %v923, %v966
        %v968 = vlaneseq
        %v969 = vshrl.u32 %v968, 7
        %v970 = vsub.s32 2, %v969
        %v971 = vrot.slane %v924, %v970
        %v972 = vmul.f32 %v962, %v967
        %v973 = vmul.f32 %v962, %v971
        %v974 = vadd.f32 %v958, %v972
        %v975 = vadd.f32 %v959, %v973
        %976 = vset.pattern.permute.xlu0 3
        %977 = vperm.xlu0 %976, %v926
        %v978 = vpop.permute.xlu0 %977
        %v980 = vlaneseq
        %v981 = vshrl.u32 %v980, 7
        %v982 = vsub.s32 3, %v981
        %v983 = vrot.slane %v923, %v982
        %v984 = vlaneseq
        %v985 = vshrl.u32 %v984, 7
        %v986 = vsub.s32 3, %v985
        %v987 = vrot.slane %v924, %v986
        %v988 = vmul.f32 %v978, %v983
        %v989 = vmul.f32 %v978, %v987
        %v990 = vadd.f32 %v974, %v988
        %v991 = vadd.f32 %v975, %v989
        %992 = vst [vmem:[%s163] sm:$0xff] %v990
        %993 = vst [vmem:[%s163 + $0x8] sm:$0xff] %v991
        %s994 = sand.u32 %s93, 1
        %s995 = scalar_lea.sflag [#allocation3], %s994
        %s996 = sand.u32 %s93, 1
        %s997 = smul.addr %s996, 16
        %s998 = scalar_lea.vmem [#allocation2], %s997
        // Predicated region
        $region33: #{tpu_custom_call.1} parent=31 // pred_check
          %p999 = pneg %p103
        $region34: #{tpu_custom_call.1} parent=31 // pred_check_branch
          %1001 = sbr.rel (%p999) target = $region36
        $region35: #{tpu_custom_call.1} parent=31 // pred_region
          %s1003 = ssub.s32 256, 256
          %1004 = vsyncadd %s995, %s1003
          %s1005 = smul.addr %s17, 2
          %s1006 = smul.addr %s1005, 128
          %s1007 = scalar_lea.hbm %s3, %s1006
          %s1009 = sshll.u32 %s998, 4
          %s1010 = int_to_ptr.vmem [resolvable:$true] %s1009
          %1012 = dma.vmem_to_hbm [thread:$0]  %s1010, 256, %s1007, %s995
        $region36: #{tpu_custom_call.1} parent=31 // pred_fallthru
          _
      $region32: #{tpu_custom_call.1} parent=5 // pred_fallthru
        _
      %p1013 = scmp.le.s32.totalorder 2, %s12
      // Predicated region
      $region37: #{tpu_custom_call.1} parent=5 // pred_check
        %p1014 = pneg %p1013
      $region38: #{tpu_custom_call.1} parent=5 // pred_check_branch
        %1016 = sbr.rel (%p1014) target = $region40
      $region39: #{tpu_custom_call.1} parent=5 // pred_region
        %s1017 = ssub.s32 %s12, 2
        // Predicated region
        $region41: #{tpu_custom_call.1} parent=39 // pred_check
          %p1018 = pneg %p109
        $region42: #{tpu_custom_call.1} parent=39 // pred_check_branch
          %1020 = sbr.rel (%p1018) target = $region44
        $region43: #{tpu_custom_call.1} parent=39 // pred_region
          %s1021 = sand.u32 %s94, 1
          %s1022 = scalar_lea.sflag [#allocation3], %s1021
          %s1023 = sand.u32 %s94, 1
          %s1024 = smul.addr %s1023, 16
          %s1025 = scalar_lea.vmem [#allocation2], %s1024
          %1026 = dma.done %s1022, 256
        $region44: #{tpu_custom_call.1} parent=39 // pred_fallthru
          _
      $region40: #{tpu_custom_call.1} parent=5 // pred_fallthru
        _
    $region6: #{tpu_custom_call.1} parent=1 // loop_footer
      %s16 = sadd.s32 1, %s12
    $region7: #{tpu_custom_call.1} parent=1 // loop_footer_branch
      %11 = sbr.rel target = $region3
    $region8: #{tpu_custom_call.1} parent=1 // loop_exit
      _
    %1027 = vsyncpa [#allocation3], 1
    %s1028 = scalar_lea.sflag [#allocation3], 1
    %1029 = vsyncpa %s1028, 1

</llo_original>
